<compile_context>
chip_gen: v7x
topology: tpu7x:2x2x1
jax: 0.10.0
libtpu: 0.0.40
codegen_flags: <defaults>
</compile_context>

<pallas_src>
import functools

import jax
import jax.numpy as jnp
from jax.experimental import pallas as pl
from jax.experimental.pallas import tpu as pltpu


def _round_up(x, m):
    return (x + m - 1) // m * m


def _kd_ensemble_kernel(ys_ref, yt_ref, out_ref, pt_acc_ref, *,
                        temperature, num_teachers, batch, tile_b, mask_rows):
    T = float(temperature)
    inv_T = 1.0 / T
    inv_K = 1.0 / float(num_teachers)
    scale = (T * T) / float(batch)

    b = pl.program_id(0)
    k = pl.program_id(1)
    nk = pl.num_programs(1)

    # ---- per-batch-tile init of the teacher-softmax accumulator ----
    @pl.when(k == 0)
    def _():
        pt_acc_ref[...] = jnp.zeros_like(pt_acc_ref)

    # ---- teacher k: softmax(y_t[k] / T) over the class (last) axis ----
    # Class block == full C, so no undefined class lanes exist; any undefined
    # batch-tail rows stay confined to their own row (per-row softmax).
    yt = yt_ref[...].astype(jnp.float32) * inv_T                  # [TB, C]
    m_t = jnp.max(yt, axis=-1, keepdims=True)
    e_t = jnp.exp(yt - m_t)
    denom = jnp.sum(e_t, axis=-1, keepdims=True)                  # [TB, 1]
    # per-row reciprocal + broadcast multiply instead of TB*C divides
    pt_acc_ref[...] += e_t * pl.reciprocal(denom)

    # ---- finalize this batch tile on the last teacher ----
    @pl.when(k == nk - 1)
    def _():
        # student log_softmax(y_s / T); y_s block stays resident across k.
        ys = ys_ref[...].astype(jnp.float32) * inv_T              # [TB, C]
        m_s = jnp.max(ys, axis=-1, keepdims=True)
        z_s = ys - m_s
        lse = jnp.log(jnp.sum(jnp.exp(z_s), axis=-1, keepdims=True))
        log_p_s = z_s - lse                                       # [TB, C]

        p_avg = pt_acc_ref[...] * inv_K                           # [TB, C]
        kl = jnp.where(p_avg > 0.0,
                       p_avg * (jnp.log(p_avg) - log_p_s),
                       0.0)
        if mask_rows:
            # batch-tail rows of the edge block are undefined -> zero them.
            # (jnp.where is a select, so NaN/inf in masked rows cannot leak.)
            row = jax.lax.broadcasted_iota(jnp.int32, kl.shape, 0) + b * tile_b
            kl = jnp.where(row < batch, kl, 0.0)

        # one partial sum per batch tile; T^2/B folded in here.
        out_ref[0, 0] = jnp.sum(kl) * scale


def kd_ensemble_loss(y_s, y_t, temperature):
    """Pallas-backed KDEnsemble.forward(y_s, y_t).

    y_s: [B, C] student logits (f32 or bf16).
    y_t: stacked [K, B, C] teacher logits (preferred — avoids an HBM concat),
         or a list/tuple of K arrays of shape [B, C].
    """
    if isinstance(y_t, (list, tuple)):
        # Prefer passing a stacked array; this concat re-reads K*B*C in HBM.
        y_t = jnp.stack(y_t, axis=0)

    K, B, C = y_t.shape
    assert y_s.shape == (B, C), (y_s.shape, y_t.shape)

    # ---- generation-aware tile sizing -----------------------------------
    Cp = _round_up(C, 128)                      # physical lane footprint
    bytes_s = jnp.dtype(y_s.dtype).itemsize
    bytes_t = jnp.dtype(y_t.dtype).itemsize
    min_bytes = min(bytes_s, bytes_t)
    sub = 8 if min_bytes >= 4 else (16 if min_bytes == 2 else 32)

    try:
        vmem_cap = int(pltpu.get_tpu_info().vmem_capacity_bytes)
    except Exception:  # pragma: no cover - conservative fallback
        vmem_cap = 64 * 2 ** 20                 # v7x-safe default

    # Per batch-row VMEM bytes: double-buffered student + teacher blocks,
    # the f32 teacher-softmax accumulator, and ~4 full-tile f32 temporaries
    # materialized by the finalize step (e_t / z_s / log_p_s / p_avg / kl).
    per_row = Cp * (2 * bytes_s + 2 * bytes_t) + Cp * 4 + 4 * Cp * 4
    budget = max(16 * 2 ** 20, int(vmem_cap * 0.55))
    tb_cap = budget // per_row
    tb_cap = max(sub, (tb_cap // sub) * sub)
    tb_cap = min(tb_cap, 2048)
    TB = min(tb_cap, _round_up(B, sub))
    NB = (B + TB - 1) // TB
    mask_rows = (NB * TB) > B

    vmem_need = TB * per_row + (4 << 20)
    vmem_limit = int(min(vmem_cap - (8 << 20), max(vmem_need, 16 * 2 ** 20)))

    kernel = functools.partial(
        _kd_ensemble_kernel,
        temperature=float(temperature),
        num_teachers=K,
        batch=B,
        tile_b=TB,
        mask_rows=mask_rows,
    )

    partials = pl.pallas_call(
        kernel,
        out_shape=jax.ShapeDtypeStruct((NB, 1), jnp.float32),
        grid_spec=pltpu.PrefetchScalarGridSpec(
            num_scalar_prefetch=0,
            grid=(NB, K),
            in_specs=[
                # student tile: same block for every k -> stays resident
                pl.BlockSpec((TB, C), lambda b, k: (b, 0)),
                # one teacher tile at a time, streamed along the k grid axis
                pl.BlockSpec((None, TB, C), lambda b, k: (k, b, 0)),
            ],
            # one partial loss per batch tile -> batch axis is independent
            out_specs=pl.BlockSpec((1, 1), lambda b, k: (b, 0),
                                   memory_space=pltpu.SMEM),
            scratch_shapes=[
                pltpu.VMEM((TB, C), jnp.float32),   # teacher-softmax accum
            ],
        ),
        compiler_params=pltpu.CompilerParams(
            # batch tiles are independent (per-tile partials) -> megacore on
            # v7x; the teacher axis carries the accumulator -> arbitrary.
            dimension_semantics=("parallel", "arbitrary"),
            vmem_limit_bytes=vmem_limit,
        ),
    )(y_s, y_t)
    # TODO(synk): for vocab-sized C (roughly Cp >~ 100K in f32) additionally
    # tile the class axis with an online (running-max) softmax instead of
    # holding full [TB, C] rows in VMEM.
    return jnp.sum(partials)


def _reference(y_s, y_t_list, T):
    """Pure-JAX reference mirroring the PyTorch code (computed in f32)."""
    y_s = y_s.astype(jnp.float32)
    y_t_list = [y.astype(jnp.float32) for y in y_t_list]
    log_p_s = jax.nn.log_softmax(y_s / T, axis=1)
    p_t = jnp.zeros_like(y_t_list[0])
    for y_ti in y_t_list:
        p_t = p_t + jax.nn.softmax(y_ti / T, axis=1)
    p_t = p_t / len(y_t_list)
    kl = jnp.where(p_t > 0, p_t * (jnp.log(p_t) - log_p_s), 0.0)
    return jnp.sum(kl) * T ** 2 / y_s.shape[0]


if __name__ == "__main__":
    key = jax.random.PRNGKey(0)

    # Case 1: aligned shapes, f32.  batch=8, classes=32, 3 teachers, T=4.0
    B, C, K, T = 8, 32, 3, 4.0
    k_s, k_t, key = jax.random.split(key, 3)
    y_s = jax.random.normal(k_s, (B, C), dtype=jnp.float32)
    y_t = jax.random.normal(k_t, (K, B, C), dtype=jnp.float32)
    loss = jax.block_until_ready(kd_ensemble_loss(y_s, y_t, T))
    ref = _reference(y_s, [y_t[i] for i in range(K)], T)
    assert jnp.allclose(loss, ref, rtol=1e-5, atol=1e-5), (loss, ref)

    # Case 2: ragged batch + ragged class count, bf16 logits (no padding,
    # no wrapper-side casts).  batch=10, classes=37, 2 teachers, T=2.0
    B2, C2, K2, T2 = 10, 37, 2, 2.0
    k_s2, k_t2, key = jax.random.split(key, 3)
    y_s2 = jax.random.normal(k_s2, (B2, C2), dtype=jnp.bfloat16)
    y_t2 = jax.random.normal(k_t2, (K2, B2, C2), dtype=jnp.bfloat16)
    loss2 = jax.block_until_ready(kd_ensemble_loss(y_s2, y_t2, T2))
    ref2 = _reference(y_s2, [y_t2[i] for i in range(K2)], T2)
    assert jnp.allclose(loss2, ref2, rtol=1e-4, atol=1e-4), (loss2, ref2)

    print("KERNEL_OK")
</pallas_src>

<mosaic_0001>
module attributes {stable_mosaic.version = 11 : i64} {
  func.func @_kd_ensemble_kernel(%arg0: i32, %arg1: i32, %arg2: memref<8x32xf32, #tpu.memory_space<vmem>>, %arg3: memref<1x8x32xf32, #tpu.memory_space<vmem>>, %arg4: memref<1x1xf32, #tpu.memory_space<smem>>, %arg5: memref<8x32xf32, #tpu.memory_space<vmem>>) attributes {dimension_semantics = [#tpu.dimension_semantics<parallel>, #tpu.dimension_semantics<arbitrary>], iteration_bounds = array<i64: 1, 3>, scalar_prefetch = 0 : i64, scratch_operands = 1 : i64, tpu.core_type = #tpu.core_type<tc>, window_params = [{transform_indices = @transform_0, window_bounds = array<i64: 8, 32>}, {transform_indices = @transform_1, window_bounds = array<i64: 1, 8, 32>}, {transform_indices = @transform_2, window_bounds = array<i64: 1, 1>}]} {
    %c0_i32 = arith.constant 0 : i32
    %0 = arith.cmpi eq, %arg1, %c0_i32 : i32
    %1 = arith.extui %0 : i1 to i32
    %c0_i32_0 = arith.constant 0 : i32
    %2 = arith.cmpi ne, %1, %c0_i32_0 : i32
    scf.if %2 {
      %cst_10 = arith.constant 0.000000e+00 : f32
      %23 = vector.broadcast %cst_10 : f32 to vector<8x32xf32>
      %c0_11 = arith.constant 0 : index
      %c0_12 = arith.constant 0 : index
      %24 = vector.load %arg5[%c0_11, %c0_12] : memref<8x32xf32, #tpu.memory_space<vmem>>, vector<8x32xf32>
      tpu.vector_store %arg5[%c0_11, %c0_12], %23 {strides = array<i32>} : memref<8x32xf32, #tpu.memory_space<vmem>>, vector<8x32xf32>,
    } else {
    }
    %c0 = arith.constant 0 : index
    %c0_1 = arith.constant 0 : index
    %c0_2 = arith.constant 0 : index
    %3 = vector.load %arg3[%c0, %c0_1, %c0_2] : memref<1x8x32xf32, #tpu.memory_space<vmem>>, vector<1x8x32xf32>
    %4 = vector.shape_cast %3 : vector<1x8x32xf32> to vector<8x32xf32>
    %cst = arith.constant 2.500000e-01 : f32
    %5 = vector.broadcast %cst : f32 to vector<8x32xf32>
    %6 = arith.mulf %4, %5 : vector<8x32xf32>
    %cst_3 = arith.constant dense<0xFF800000> : vector<8xf32>
    %7 = vector.multi_reduction <maximumf>, %6, %cst_3 [1] : vector<8x32xf32> to vector<8xf32>
    %8 = vector.shape_cast %7 : vector<8xf32> to vector<8x1xf32>
    %9 = vector.broadcast %8 : vector<8x1xf32> to vector<8x32xf32>
    %10 = arith.subf %6, %9 : vector<8x32xf32>
    %11 = math.exp %10 : vector<8x32xf32>
    %cst_4 = arith.constant dense<0.000000e+00> : vector<8xf32>
    %12 = vector.multi_reduction <add>, %11, %cst_4 [1] : vector<8x32xf32> to vector<8xf32>
    %13 = vector.shape_cast %12 : vector<8xf32> to vector<8x1xf32>
    %c0_5 = arith.constant 0 : index
    %c0_6 = arith.constant 0 : index
    %14 = vector.load %arg5[%c0_5, %c0_6] : memref<8x32xf32, #tpu.memory_space<vmem>>, vector<8x32xf32>
    %15 = tpu.reciprocal %13 : vector<8x1xf32> -> vector<8x1xf32>
    %16 = vector.broadcast %15 : vector<8x1xf32> to vector<8x32xf32>
    %17 = arith.mulf %11, %16 : vector<8x32xf32>
    %18 = arith.addf %14, %17 : vector<8x32xf32>
    %c0_7 = arith.constant 0 : index
    %c0_8 = arith.constant 0 : index
    %19 = vector.load %arg5[%c0_7, %c0_8] : memref<8x32xf32, #tpu.memory_space<vmem>>, vector<8x32xf32>
    tpu.vector_store %arg5[%c0_7, %c0_8], %18 {strides = array<i32>} : memref<8x32xf32, #tpu.memory_space<vmem>>, vector<8x32xf32>,
    %c2_i32 = arith.constant 2 : i32
    %20 = arith.cmpi eq, %arg1, %c2_i32 : i32
    %21 = arith.extui %20 : i1 to i32
    %c0_i32_9 = arith.constant 0 : i32
    %22 = arith.cmpi ne, %21, %c0_i32_9 : i32
    scf.if %22 {
      %c0_10 = arith.constant 0 : index
      %c0_11 = arith.constant 0 : index
      %23 = vector.load %arg2[%c0_10, %c0_11] : memref<8x32xf32, #tpu.memory_space<vmem>>, vector<8x32xf32>
      %cst_12 = arith.constant 2.500000e-01 : f32
      %24 = vector.broadcast %cst_12 : f32 to vector<8x32xf32>
      %25 = arith.mulf %23, %24 : vector<8x32xf32>
      %cst_13 = arith.constant dense<0xFF800000> : vector<8xf32>
      %26 = vector.multi_reduction <maximumf>, %25, %cst_13 [1] : vector<8x32xf32> to vector<8xf32>
      %27 = vector.shape_cast %26 : vector<8xf32> to vector<8x1xf32>
      %28 = vector.broadcast %27 : vector<8x1xf32> to vector<8x32xf32>
      %29 = arith.subf %25, %28 : vector<8x32xf32>
      %30 = math.exp %29 : vector<8x32xf32>
      %cst_14 = arith.constant dense<0.000000e+00> : vector<8xf32>
      %31 = vector.multi_reduction <add>, %30, %cst_14 [1] : vector<8x32xf32> to vector<8xf32>
      %32 = vector.shape_cast %31 : vector<8xf32> to vector<8x1xf32>
      %33 = math.log %32 : vector<8x1xf32>
      %34 = vector.broadcast %33 : vector<8x1xf32> to vector<8x32xf32>
      %35 = arith.subf %29, %34 : vector<8x32xf32>
      %c0_15 = arith.constant 0 : index
      %c0_16 = arith.constant 0 : index
      %36 = vector.load %arg5[%c0_15, %c0_16] : memref<8x32xf32, #tpu.memory_space<vmem>>, vector<8x32xf32>
      %cst_17 = arith.constant 0.333333343 : f32
      %37 = vector.broadcast %cst_17 : f32 to vector<8x32xf32>
      %38 = arith.mulf %36, %37 : vector<8x32xf32>
      %cst_18 = arith.constant 0.000000e+00 : f32
      %39 = vector.broadcast %cst_18 : f32 to vector<8x32xf32>
      %40 = arith.cmpf ogt, %38, %39 : vector<8x32xf32>
      %41 = math.log %38 : vector<8x32xf32>
      %42 = arith.subf %41, %35 : vector<8x32xf32>
      %43 = arith.mulf %38, %42 : vector<8x32xf32>
      %cst_19 = arith.constant 0.000000e+00 : f32
      %44 = vector.broadcast %cst_19 : f32 to vector<8x32xf32>
      %45 = arith.select %40, %43, %44 : vector<8x32xi1>, vector<8x32xf32>
      %46 = vector.shape_cast %45 : vector<8x32xf32> to vector<1x8x32xf32>
      %cst_20 = arith.constant dense<0.000000e+00> : vector<1xf32>
      %47 = vector.multi_reduction <add>, %46, %cst_20 [1, 2] : vector<1x8x32xf32> to vector<1xf32>
      %48 = vector.shape_cast %47 : vector<1xf32> to vector<1x1x1xf32>
      %49 = vector.extract %48[0, 0, 0] : f32 from vector<1x1x1xf32>
      %cst_21 = arith.constant 2.000000e+00 : f32
      %50 = arith.mulf %49, %cst_21 : f32
      %c0_22 = arith.constant 0 : index
      %c0_23 = arith.constant 0 : index
      %51 = memref.load %arg4[%c0_22, %c0_23] : memref<1x1xf32, #tpu.memory_space<smem>>
      memref.store %50, %arg4[%c0_22, %c0_23] : memref<1x1xf32, #tpu.memory_space<smem>>
    } else {
    }
    return
  }
  func.func @transform_0(%arg0: i32, %arg1: i32) -> (i32, i32) {
    %c0_i32 = arith.constant 0 : i32
    %c0_i32_0 = arith.constant 0 : i32
    return %arg0, %c0_i32 : i32, i32
  }
  func.func @transform_1(%arg0: i32, %arg1: i32) -> (i32, i32, i32) {
    %c0_i32 = arith.constant 0 : i32
    %c0_i32_0 = arith.constant 0 : i32
    return %arg1, %arg0, %c0_i32 : i32, i32, i32
  }
  func.func @transform_2(%arg0: i32, %arg1: i32) -> (i32, i32) {
    %c0_i32 = arith.constant 0 : i32
    %c0_i32_0 = arith.constant 0 : i32
    return %arg0, %c0_i32 : i32, i32
  }
}

</mosaic_0001>

<llo_original>
// kernel: tpu_custom_call.1
$region0: #{tpu_custom_call.1}
  #allocation0 [shape = 'u32[]', space=smem, size = 0x4, offset = 0x4, fixed_abs, tag = 'smem constant byte address 0x4 - core index']
  #allocation1 [shape = 'u32[144,128]{1,0:T(1,128)}', space=vmem, size = 0x12000, scoped, tag = 'internal scratch']
  #allocation2 [shape = 'f32[8,32]{1,0:T(8,128)}', space=vmem, size = 0x1000, scoped, tag = 'scratch operand']
  %s0 = inlined_call_operand.hbm [shape: f32[8,32], index: 0, kind: input, shape index: {}]
  %s1 = inlined_call_operand.hbm [shape: f32[3,8,32], index: 1, kind: input, shape index: {}]
  %s2 = inlined_call_operand.hbm [shape: f32[1,1], index: 2, kind: output, shape index: {}]
  %s3 = sld [smem:[#allocation0]]
  $region57: #{tpu_custom_call.1} parent=0
    _
  %s5 = ssub.s32 1, %s3
  %s6 = scalar_select 0, %s5, %s3
  $region1: #{tpu_custom_call.1} parent=0
    #allocation3 [shape = 'u8[4096]{0}', space=vmem, size = 0x1000, scoped, tag = 'input window, operand 0, single buffered']
    #allocation4 [shape = 's32[2]{0}', space=sflag, size = 0x8, scoped, tag = 'scoped memory for tpu_custom_call.1']
    #allocation5 [shape = 's32[2]{0}', space=sflag, size = 0x8, scoped, tag = 'scoped memory for tpu_custom_call.1']
    #allocation6 [shape = 'u8[8192]{0}', space=vmem, size = 0x2000, scoped, tag = 'input window, operand 1']
    #allocation7 [shape = 's32[2]{0}', space=sflag, size = 0x8, scoped, tag = 'scoped memory for tpu_custom_call.1']
    #allocation8 [shape = 'u8[512]{0}', space=smem, size = 0x200, scoped, tag = 'output window, operand 0, single buffered']
    %7 = vsyncpa [#allocation4], 0
    %8 = vsyncpa [#allocation7], 0
    %s9 = scalar_lea.sflag [#allocation7], 1
    %10 = vsyncpa %s9, 0
    %11 = vsyncpa [#allocation5], 0
    loop: start=0, step=1, limit=5
    $region2: #{tpu_custom_call.1} parent=1 // loop_pre_header
      _
    $region3: #{tpu_custom_call.1} parent=1 // loop_header
      %s13 = sphi 0, %s17
      %p14 = scmp.ge.s32.totalorder %s13, 5
      %s20 = sphi 0, %s32
      %s21 = sphi 0, %s28
      %s22 = sphi 0, %s20
      %s23 = sphi 0, %s21
      %s24 = sphi 0, %s22
      %s25 = sphi 0, %s23
      %s35 = sphi 0, %s37
      %s38 = sphi 0, %s35
      %s39 = sphi 0, %s38
      %s55 = sphi 0, %s39
      %s63 = sphi 0, %s65
      %s66 = sphi 0, %s63
      %s67 = sphi 0, %s66
      %s83 = sphi 0, %s67
      %s89 = sphi 0, %s91
      %s92 = sphi 0, %s89
      %s93 = sphi 0, %s92
      %s109 = sphi 0, %s93
    $region4: #{tpu_custom_call.1} parent=1 // loop_header_branch
      %16 = sbr.rel (%p14) target = $region8
    $region5: #{tpu_custom_call.1} parent=1 // loop_body
      %s18 = ssub.s32 %s13, 1
      %s19 = ssub.s32 %s13, 2
      %s26 = sadd.s32 1, %s21
      %p27 = scmp.ge.s32.totalorder %s26, 3
      %s28 = scalar_select %p27, 0, %s26
      %s29 = sadd.s32 1, %s20
      %s30 = scalar_select %p27, %s29, %s20
      %p31 = scmp.ge.s32.totalorder %s30, 1
      %s32 = scalar_select %p31, 0, %s30
      %s33 = ssub.s32 %s20, %s32
      %p34 = scmp.eq.s32.totalorder %s33, 0
      %s36 = sadd.s32 %s35, 1
      %s37 = scalar_select %p34, %s35, %s36
      %p40 = pneg %p34
      %p41 = scmp.eq.s32.totalorder %s13, 2
      %p42 = por %p40, %p41
      %p43 = scmp.ne.s32.totalorder %s35, %s38
      %p44 = scmp.eq.s32.totalorder %s13, 0
      %p45 = por %p43, %p44
      %p46 = scmp.ne.s32.totalorder %s35, %s38
      %p47 = scmp.eq.s32.totalorder %s18, 2
      %p48 = por %p46, %p47
      %p49 = scmp.ne.s32.totalorder %s38, %s39
      %p50 = scmp.eq.s32.totalorder %s18, 0
      %p51 = por %p49, %p50
      %p52 = scmp.ne.s32.totalorder %s38, %s39
      %p53 = scmp.eq.s32.totalorder %s19, 2
      %p54 = por %p52, %p53
      %p56 = scmp.ne.s32.totalorder %s39, %s55
      %p57 = scmp.eq.s32.totalorder %s19, 0
      %p58 = por %p56, %p57
      %s59 = ssub.s32 %s21, %s28
      %s60 = ssub.s32 %s20, %s32
      %s61 = sor.u32 %s59, %s60
      %p62 = scmp.eq.s32.totalorder %s61, 0
      %s64 = sadd.s32 %s63, 1
      %s65 = scalar_select %p62, %s63, %s64
      %p68 = pneg %p62
      %p69 = scmp.eq.s32.totalorder %s13, 2
      %p70 = por %p68, %p69
      %p71 = scmp.ne.s32.totalorder %s63, %s66
      %p72 = scmp.eq.s32.totalorder %s13, 0
      %p73 = por %p71, %p72
      %p74 = scmp.ne.s32.totalorder %s63, %s66
      %p75 = scmp.eq.s32.totalorder %s18, 2
      %p76 = por %p74, %p75
      %p77 = scmp.ne.s32.totalorder %s66, %s67
      %p78 = scmp.eq.s32.totalorder %s18, 0
      %p79 = por %p77, %p78
      %p80 = scmp.ne.s32.totalorder %s66, %s67
      %p81 = scmp.eq.s32.totalorder %s19, 2
      %p82 = por %p80, %p81
      %p84 = scmp.ne.s32.totalorder %s67, %s83
      %p85 = scmp.eq.s32.totalorder %s19, 0
      %p86 = por %p84, %p85
      %s87 = ssub.s32 %s20, %s32
      %p88 = scmp.eq.s32.totalorder %s87, 0
      %s90 = sadd.s32 %s89, 1
      %s91 = scalar_select %p88, %s89, %s90
      %p94 = pneg %p88
      %p95 = scmp.eq.s32.totalorder %s13, 2
      %p96 = por %p94, %p95
      %p97 = scmp.ne.s32.totalorder %s89, %s92
      %p98 = scmp.eq.s32.totalorder %s13, 0
      %p99 = por %p97, %p98
      %p100 = scmp.ne.s32.totalorder %s89, %s92
      %p101 = scmp.eq.s32.totalorder %s18, 2
      %p102 = por %p100, %p101
      %p103 = scmp.ne.s32.totalorder %s92, %s93
      %p104 = scmp.eq.s32.totalorder %s18, 0
      %p105 = por %p103, %p104
      %p106 = scmp.ne.s32.totalorder %s92, %s93
      %p107 = scmp.eq.s32.totalorder %s19, 2
      %p108 = por %p106, %p107
      %p110 = scmp.ne.s32.totalorder %s93, %s109
      %p111 = scmp.eq.s32.totalorder %s19, 0
      %p112 = por %p110, %p111
      %p113 = scmp.le.s32.totalorder 1, %s13
      %p114 = scmp.lt.s32.totalorder %s13, 4
      %p115 = pnand %p113, %p114
      %p116 = pneg %p115
      // Predicated region
      $region9: #{tpu_custom_call.1} parent=5 // pred_check
        _
      $region10: #{tpu_custom_call.1} parent=5 // pred_check_branch
        %118 = sbr.rel (%p115) target = $region12
      $region11: #{tpu_custom_call.1} parent=5 // pred_region
        %s119 = ssub.s32 %s13, 1
        // Predicated region
        $region13: #{tpu_custom_call.1} parent=11 // pred_check
          %p120 = pneg %p51
        $region14: #{tpu_custom_call.1} parent=11 // pred_check_branch
          %122 = sbr.rel (%p120) target = $region16
        $region15: #{tpu_custom_call.1} parent=11 // pred_region
          %s124 = ssub.s32 128, 128
          %125 = vsyncadd [#allocation4], %s124
          %s126 = smul.addr %s22, 128
          %s127 = scalar_lea.hbm %s0, %s126
          %s129 = sshll.u32 [#allocation3], 4
          %s130 = int_to_ptr.vmem [resolvable:$true] %s129
          %132 = dma.hbm_to_vmem [thread:$0]  %s127, 128, %s130, [#allocation4]
        $region16: #{tpu_custom_call.1} parent=11 // pred_fallthru
          _
      $region12: #{tpu_custom_call.1} parent=5 // pred_fallthru
        _
      %p133 = scmp.lt.s32.totalorder %s13, 3
      // Predicated region
      $region17: #{tpu_custom_call.1} parent=5 // pred_check
        %p134 = pneg %p133
      $region18: #{tpu_custom_call.1} parent=5 // pred_check_branch
        %136 = sbr.rel (%p134) target = $region20
      $region19: #{tpu_custom_call.1} parent=5 // pred_region
        // Predicated region
        $region21: #{tpu_custom_call.1} parent=19 // pred_check
          %p137 = pneg %p73
        $region22: #{tpu_custom_call.1} parent=19 // pred_check_branch
          %139 = sbr.rel (%p137) target = $region24
        $region23: #{tpu_custom_call.1} parent=19 // pred_region
          %s140 = sand.u32 %s63, 1
          %s141 = scalar_lea.sflag [#allocation7], %s140
          %s142 = sand.u32 %s63, 1
          %s143 = smul.addr %s142, 8
          %s144 = scalar_lea.vmem [#allocation6], %s143
          %s146 = ssub.s32 128, 128
          %147 = vsyncadd %s141, %s146
          %s148 = sadd.s32 %s20, %s21
          %s149 = smul.addr %s148, 128
          %s150 = scalar_lea.hbm %s1, %s149
          %s152 = sshll.u32 %s144, 4
          %s153 = int_to_ptr.vmem [resolvable:$true] %s152
          %155 = dma.hbm_to_vmem [thread:$0]  %s150, 128, %s153, %s141
        $region24: #{tpu_custom_call.1} parent=19 // pred_fallthru
          _
      $region20: #{tpu_custom_call.1} parent=5 // pred_fallthru
        _
      %p156 = scmp.le.s32.totalorder 1, %s13
      %p157 = scmp.lt.s32.totalorder %s13, 4
      %p158 = pnand %p156, %p157
      %p159 = pneg %p158
      // Predicated region
      $region25: #{tpu_custom_call.1} parent=5 // pred_check
        _
      $region26: #{tpu_custom_call.1} parent=5 // pred_check_branch
        %161 = sbr.rel (%p158) target = $region28
      $region27: #{tpu_custom_call.1} parent=5 // pred_region
        %s162 = ssub.s32 %s13, 1
        // Predicated region
        $region29: #{tpu_custom_call.1} parent=27 // pred_check
          %p163 = pneg %p51
        $region30: #{tpu_custom_call.1} parent=27 // pred_check_branch
          %165 = sbr.rel (%p163) target = $region32
        $region31: #{tpu_custom_call.1} parent=27 // pred_region
          %166 = dma.done [#allocation4], 128
        $region32: #{tpu_custom_call.1} parent=27 // pred_fallthru
          _
        %s167 = sand.u32 %s66, 1
        %s168 = scalar_lea.sflag [#allocation7], %s167
        %s169 = sand.u32 %s66, 1
        %s170 = smul.addr %s169, 8
        %s171 = scalar_lea.vmem [#allocation6], %s170
        // Predicated region
        $region33: #{tpu_custom_call.1} parent=27 // pred_check
          %p172 = pneg %p79
        $region34: #{tpu_custom_call.1} parent=27 // pred_check_branch
          %174 = sbr.rel (%p172) target = $region36
        $region35: #{tpu_custom_call.1} parent=27 // pred_region
          %175 = dma.done %s168, 128
        $region36: #{tpu_custom_call.1} parent=27 // pred_fallthru
          _
        %p176 = pneg %p51
        %p177 = pneg %p48
        %s178 = sand.u32 %s66, 1
        %s179 = scalar_lea.sflag [#allocation7], %s178
        %s180 = sand.u32 %s66, 1
        %s181 = smul.addr %s180, 8
        %s182 = scalar_lea.vmem [#allocation6], %s181
        %p183 = pneg %p79
        %p184 = pneg %p76
        %p185 = pneg %p105
        %p186 = pneg %p102
        %p187 = scmp.eq.s32.totalorder %s23, 0
        // Predicated region
        $region37: #{tpu_custom_call.1} parent=27 // pred_check
          %p188 = pneg %p187
        $region38: #{tpu_custom_call.1} parent=27 // pred_check_branch
          %190 = sbr.rel (%p188) target = $region40
        $region39: #{tpu_custom_call.1} parent=27 // pred_region
          %vm191 = vcmask 261120
          %192 = vst.msk [vmem:[#allocation2] sm:$0xff] %vm191, 0.0
        $region40: #{tpu_custom_call.1} parent=27 // pred_fallthru
          _
        %v193 = vld [vmem:[%s171] sm:$0xff]
        %v194 = vmul.f32 %v193, 0.25
        %vm195 = vcmask 261120
        %v196 = vsel %vm195, %v194, -inf
        %197 = vmax.xlane.f32.xlu0 %v196
        %v198 = vpop.xlane.xlu0 %197
        %v199 = vsub.f32 %v194, %v198
        %v200 = vmul.f32 %v199, 1.442695
        %v201 = vpow.pop %v200
        %v202 = vsel %vm195, %v201, 0.0
        %203 = vadd.xlane.f32.xlu0 %v202
        %v204 = vpop.xlane.xlu0 %203
        %v205 = vld [vmem:[#allocation2] sm:$0xff]
        %v206 = vrcp.pop %v204
        %v207 = vmul.f32 %v201, %v206
        %v208 = vadd.f32 %v205, %v207
        %209 = vst.msk [vmem:[#allocation2] sm:$0xff] %vm195, %v208
        %p210 = scmp.eq.s32.totalorder %s23, 2
        // Predicated region
        $region41: #{tpu_custom_call.1} parent=27 // pred_check
          %p211 = pneg %p210
        $region42: #{tpu_custom_call.1} parent=27 // pred_check_branch
          %213 = sbr.rel (%p211) target = $region44
        $region43: #{tpu_custom_call.1} parent=27 // pred_region
          %v214 = vld [vmem:[#allocation3] sm:$0xff]
          %v215 = vmul.f32 %v214, 0.25
          %v216 = vsel %vm195, %v215, -inf
          %217 = vmax.xlane.f32.xlu0 %v216
          %v218 = vpop.xlane.xlu0 %217
          %v219 = vsub.f32 %v215, %v218
          %v220 = vmul.f32 %v219, 1.442695
          %v221 = vpow.pop %v220
          %v222 = vsel %vm195, %v221, 0.0
          %223 = vadd.xlane.f32.xlu0 %v222
          %v224 = vpop.xlane.xlu0 %223
          %v225 = vlog2.pop %v224
          %v226 = vmul.f32 %v225, 0.6931472
          %v227 = vsub.f32 %v219, %v226
          %v228 = vld [vmem:[#allocation2] sm:$0xff]
          %v229 = vmul.f32 %v228, 0.33333334
          %vm230 = vcmp.gt.f32.partialorder %v229, 0.0
          %v231 = vlog2.pop %v229
          %v232 = vmul.f32 %v231, 0.6931472
          %v233 = vsub.f32 %v232, %v227
          %v234 = vmul.f32 %v229, %v233
          %v235 = vsel %vm230, %v234, 0.0
          %v236 = vsel %vm195, %v235, 0.0
          %237 = vadd.xlane.f32.xlu0 %v236
          %v238 = vpop.xlane.xlu0 %237
          %v239 = vrot.slane %v238, 4
          %v240 = vadd.f32 %v238, %v239
          %v241 = vrot.slane %v240, 2
          %v242 = vadd.f32 %v240, %v241
          %v243 = vrot.slane %v242, 1
          %v244 = vadd.f32 %v242, %v243
          %s245 = vtos %v244
          %s246 = smul.f32 %s245, 2.0
          %s247 = scalar_lea.smem [#allocation8], 0
          %248 = sst [smem:[%s247]] %s246
        $region44: #{tpu_custom_call.1} parent=27 // pred_fallthru
          _
        // Predicated region
        $region45: #{tpu_custom_call.1} parent=27 // pred_check
          %p249 = pneg %p102
        $region46: #{tpu_custom_call.1} parent=27 // pred_check_branch
          %251 = sbr.rel (%p249) target = $region48
        $region47: #{tpu_custom_call.1} parent=27 // pred_region
          %s253 = ssub.s32 16, 16
          %254 = vsyncadd [#allocation5], %s253
          %s255 = smul.addr %s22, 16
          %s256 = scalar_lea.hbm %s2, %s255
          %259 = dma.smem_to_hbm [#allocation8], 16, %s256, [#allocation5]
        $region48: #{tpu_custom_call.1} parent=27 // pred_fallthru
          _
        // Predicated region
        $region49: #{tpu_custom_call.1} parent=27 // pred_check
          %p260 = pneg %p102
        $region50: #{tpu_custom_call.1} parent=27 // pred_check_branch
          %262 = sbr.rel (%p260) target = $region52
        $region51: #{tpu_custom_call.1} parent=27 // pred_region
          %263 = dma.done [#allocation5], 16
        $region52: #{tpu_custom_call.1} parent=27 // pred_fallthru
          _
        %264 = sfence
      $region28: #{tpu_custom_call.1} parent=5 // pred_fallthru
        _
      %p265 = scmp.le.s32.totalorder 2, %s13
      // Predicated region
      $region53: #{tpu_custom_call.1} parent=5 // pred_check
        %p266 = pneg %p265
      $region54: #{tpu_custom_call.1} parent=5 // pred_check_branch
        %268 = sbr.rel (%p266) target = $region56
      $region55: #{tpu_custom_call.1} parent=5 // pred_region
        %s269 = ssub.s32 %s13, 2
      $region56: #{tpu_custom_call.1} parent=5 // pred_fallthru
        _
    $region6: #{tpu_custom_call.1} parent=1 // loop_footer
      %s17 = sadd.s32 1, %s13
    $region7: #{tpu_custom_call.1} parent=1 // loop_footer_branch
      %12 = sbr.rel target = $region3
    $region8: #{tpu_custom_call.1} parent=1 // loop_exit
      _
    %270 = vsyncpa [#allocation4], 1
    %s271 = scalar_lea.sflag [#allocation4], 1
    %272 = vsyncpa %s271, 1
    %273 = vsyncpa [#allocation7], 1
    %s274 = scalar_lea.sflag [#allocation7], 1
    %275 = vsyncpa %s274, 1
    %276 = vsyncpa [#allocation5], 1
    %s277 = scalar_lea.sflag [#allocation5], 1
    %278 = vsyncpa %s277, 1

</llo_original>
